<compile_context>
chip_gen: v7x
topology: tpu7x:2x2x1
jax: 0.10.0
libtpu: 0.0.40
codegen_flags: <defaults>
</compile_context>

<pallas_src>
import jax
import jax.numpy as jnp
from jax.experimental import pallas as pl
from jax.experimental.pallas import tpu as pltpu


def _round_up(x, m):
    return ((x + m - 1) // m) * m


def _num_tensorcores():
    """TensorCores per chip (megacore detection for grid-depth sizing)."""
    try:
        kind = jax.devices()[0].device_kind.lower()
    except Exception:
        return 1
    if "v7" in kind:
        return 2                                      # v7x: 2 TCs / chip
    if "v4" in kind:
        return 2                                      # v4 megacore
    if "v5p" in kind or ("v5" in kind and "lite" not in kind and "v5e" not in kind):
        return 2                                      # v5p megacore
    return 1                                          # v5e / v6e: single TC


def _vmem_capacity_bytes():
    try:
        return int(pltpu.get_tpu_info().vmem_capacity_bytes)
    except Exception:
        return 64 * 1024 * 1024                       # v7x-safe fallback


def _ffn_kernel(x_ref, w1_ref, b1_ref, w2_ref, b2_ref, o_ref):
    # x_ref:  (TM, E)  native activation dtype
    # w1_ref: (E, Hp)  b1_ref: (1, Hp)
    # w2_ref: (Hp, Ep) b2_ref: (1, Ep)   o_ref: (TM, Ep)
    #
    # Cast the activation tile to the MXU operand dtype here (one VPU cast on a
    # VMEM-resident tile) instead of in the wrapper (a separate full HBM pass).
    x = x_ref[...].astype(w1_ref.dtype)
    # First matmul on the MXU with f32 accumulation; bias stays a (1, Hp)
    # broadcast against the accumulator (never materialized as (TM, Hp)).
    h = jnp.dot(x, w1_ref[...], preferred_element_type=jnp.float32) + b1_ref[...]
    h = jnp.maximum(h, 0.0)                           # ReLU on the VPU, f32
    y = jnp.dot(h.astype(w2_ref.dtype), w2_ref[...],
                preferred_element_type=jnp.float32) + b2_ref[...]
    o_ref[...] = y.astype(o_ref.dtype)


def feed_forward(x, w1, b1, w2, b2, *, row_tile=512, matmul_dtype=None,
                 out_dtype=None):
    """Feed_Forward_Module forward.

    x:  (..., E)
    w1: (E, H)   b1: (H,)    -- nn.Linear W1 weight, stored transposed
    w2: (H, Eo)  b2: (Eo,)   -- nn.Linear W2 weight, stored transposed
    matmul_dtype: MXU operand dtype (e.g. jnp.bfloat16 on v6e/v7x); accumulation
                  and elementwise math stay f32.  x is cast inside the kernel.
    out_dtype:    output dtype (defaults to x.dtype); pass bf16 to halve output
                  HBM bytes if downstream tolerates it.
    """
    orig_shape = x.shape
    E = orig_shape[-1]
    H = w1.shape[1]
    Eo = w2.shape[1]

    out_dtype = out_dtype if out_dtype is not None else x.dtype
    mm_dtype = matmul_dtype if matmul_dtype is not None else x.dtype

    # x stays in its native dtype; the cast happens inside the kernel.
    x2d = x.reshape(-1, E)                            # (B,S,E)->(N,E) is free
    n = x2d.shape[0]

    # ---- feature-dim padding (weights/biases only, tiny & one-time) --------
    # Hidden dim padded to a lane-dense multiple of 128 so the intermediate h
    # and the second contraction are vreg-dense; zero rows/cols contribute 0.
    Hp = _round_up(H, 128)
    # Output is padded ONLY when Eo >= 128 and not a multiple of 128.  For
    # small Eo (32 here) a padded output + wrapper slice costs several extra
    # HBM passes — far more than a masked 32-lane store.
    pad_out = (Eo >= 128) and (Eo % 128 != 0)
    Ep = _round_up(Eo, 128) if pad_out else Eo

    w1_p = w1.astype(mm_dtype)
    if Hp != H:
        w1_p = jnp.pad(w1_p, ((0, 0), (0, Hp - H)))
    w2_p = w2.astype(mm_dtype)
    if Hp != H or Ep != Eo:
        w2_p = jnp.pad(w2_p, ((0, Hp - H), (0, Ep - Eo)))
    b1_p = jnp.pad(b1.astype(jnp.float32), (0, Hp - H)).reshape(1, Hp)
    b2_p = jnp.pad(b2.astype(jnp.float32), (0, Ep - Eo)).reshape(1, Ep)

    # ---- row tiling (generation-aware grid depth) ---------------------------
    x_it = jnp.dtype(x2d.dtype).itemsize
    out_it = jnp.dtype(out_dtype).itemsize
    mm_it = jnp.dtype(mm_dtype).itemsize
    sub = max(8, 32 // mm_it)                 # sublane pack: 8 f32 / 16 bf16 / 32 i8
    num_tc = _num_tensorcores()
    # Pipeline depth: >=3 steps on single-TC chips (prefetch/compute/writeback
    # overlap), >=4 steps per TensorCore on megacore chips so each core still
    # pipelines after the "parallel" split.  NOTE: tm depends on n only for
    # small/medium n (large n always gets tm == row_tile), bounding retraces.
    min_steps = 3 if num_tc == 1 else 4 * num_tc
    tm_max = _round_up(max(int(row_tile), sub), sub)
    tm_steps = _round_up(pl.cdiv(n, min_steps), sub)
    tm_floor = min(_round_up(max(n, 1), sub), 256)    # amortize ~0.35us/step
    tm = max(sub, min(tm_max, max(tm_steps, tm_floor)))

    def footprint(t, wbuf):
        return (2 * t * E * x_it                      # x tile, double-buffered
                + 2 * t * Ep * out_it                 # out tile, double-buffered
                + wbuf * ((E * Hp + Hp * Ep) * mm_it  # weights
                          + (Hp + Ep) * 4))           # biases (f32)

    budget = _vmem_capacity_bytes() * 3 // 4          # headroom for scratch
    while tm > sub and footprint(tm, 2) > budget:
        tm = max(sub, _round_up(tm // 2, sub))
    grid = (pl.cdiv(n, tm),)

    cost = pl.CostEstimate(
        flops=2 * n * (E * Hp + Hp * Ep),
        transcendentals=0,
        bytes_accessed=(n * E * x_it + n * Ep * out_it
                        + (E * Hp + Hp * Ep) * mm_it + (Hp + Ep) * 4),
    )

    # TODO(synk): for production-sized E/H (>=1024/4096, especially on v7x's
    # 64 MiB VMEM) add a K-reduction grid axis over the contraction dims with
    # an f32 VMEM accumulator (pl.when init/finalize) instead of full weight
    # blocks; at E=32/H=64 the kernel is pure HBM streaming and this is moot.
    def build(single_buffer_weights):
        # Constant-index weight/bias blocks are DMA'd once; single-buffering
        # them halves their VMEM footprint at zero perf cost.
        wkw = dict(pipeline_mode=pl.Buffered(1)) if single_buffer_weights else {}
        wbuf = 1 if single_buffer_weights else 2
        vmem_limit = int(min(budget,
                             max(16 * 1024 * 1024,
                                 2 * footprint(tm, wbuf) + 4 * 1024 * 1024)))
        return pl.pallas_call(
            _ffn_kernel,
            out_shape=jax.ShapeDtypeStruct((n, Ep), out_dtype),
            grid_spec=pltpu.PrefetchScalarGridSpec(
                num_scalar_prefetch=0,
                grid=grid,
                in_specs=[
                    pl.BlockSpec((tm, E), lambda i: (i, 0)),          # x rows
                    pl.BlockSpec((E, Hp), lambda i: (0, 0), **wkw),   # W1
                    pl.BlockSpec((1, Hp), lambda i: (0, 0), **wkw),   # b1
                    pl.BlockSpec((Hp, Ep), lambda i: (0, 0), **wkw),  # W2
                    pl.BlockSpec((1, Ep), lambda i: (0, 0), **wkw),   # b2
                ],
                out_specs=pl.BlockSpec((tm, Ep), lambda i: (i, 0)),
            ),
            compiler_params=pltpu.CompilerParams(
                dimension_semantics=("parallel",),
                vmem_limit_bytes=vmem_limit,
            ),
            cost_estimate=cost,
        )

    try:
        out = build(True)(x2d, w1_p, b1_p, w2_p, b2_p)
    except Exception:
        # Fallback if this JAX build rejects BlockSpec.pipeline_mode / Buffered(1).
        out = build(False)(x2d, w1_p, b1_p, w2_p, b2_p)

    y = out[:, :Eo] if pad_out else out
    return y.reshape(orig_shape[:-1] + (Eo,))


if __name__ == "__main__":
    embedding_dim = 32
    ff_hidden_dim = 64
    batch, seq = 2, 8

    key = jax.random.PRNGKey(0)
    k_x, k_w1, k_b1, k_w2, k_b2, k_x2 = jax.random.split(key, 6)

    # Deterministic synthetic parameters (nn.Linear shapes: W1 (H,E), W2 (E,H)),
    # stored transposed for the kernel: w1 (E,H), w2 (H,E).
    x = jax.random.normal(k_x, (batch, seq, embedding_dim), dtype=jnp.float32)
    w1 = jax.random.normal(k_w1, (embedding_dim, ff_hidden_dim),
                           dtype=jnp.float32) * 0.1
    b1 = jax.random.normal(k_b1, (ff_hidden_dim,), dtype=jnp.float32) * 0.1
    w2 = jax.random.normal(k_w2, (ff_hidden_dim, embedding_dim),
                           dtype=jnp.float32) * 0.1
    b2 = jax.random.normal(k_b2, (embedding_dim,), dtype=jnp.float32) * 0.1

    def ref_fn(xx):
        return jnp.maximum(xx @ w1 + b1, 0.0) @ w2 + b2

    # 1) f32 MXU operands (tight check).
    out = jax.block_until_ready(feed_forward(x, w1, b1, w2, b2))
    assert out.shape == x.shape
    assert jnp.allclose(out, ref_fn(x), atol=1e-5, rtol=1e-5), "f32 mismatch"

    # 2) Ragged row count: last grid tile is partial (Pallas drops OOB writeback).
    x_rag = jax.random.normal(k_x2, (3, 5, embedding_dim), dtype=jnp.float32)
    out_rag = jax.block_until_ready(feed_forward(x_rag, w1, b1, w2, b2))
    assert out_rag.shape == x_rag.shape
    assert jnp.allclose(out_rag, ref_fn(x_rag), atol=1e-5, rtol=1e-5), "ragged mismatch"

    # 3) bf16 MXU operands (v6e/v7x), f32 accumulation, in-kernel activation cast.
    out_bf16 = jax.block_until_ready(
        feed_forward(x, w1, b1, w2, b2, matmul_dtype=jnp.bfloat16))
    assert out_bf16.shape == x.shape and out_bf16.dtype == x.dtype
    assert jnp.allclose(out_bf16, ref_fn(x), atol=5e-2, rtol=5e-2), "bf16 mismatch"

    print("KERNEL_OK")
</pallas_src>

<mosaic_0001>
module attributes {stable_mosaic.version = 11 : i64} {
  func.func @_ffn_kernel(%arg0: i32, %arg1: memref<16x32xf32, #tpu.memory_space<vmem>>, %arg2: memref<32x128xf32, #tpu.memory_space<vmem>>, %arg3: memref<1x128xf32, #tpu.memory_space<vmem>>, %arg4: memref<128x32xf32, #tpu.memory_space<vmem>>, %arg5: memref<1x32xf32, #tpu.memory_space<vmem>>, %arg6: memref<16x32xf32, #tpu.memory_space<vmem>>) attributes {dimension_semantics = [#tpu.dimension_semantics<parallel>], iteration_bounds = array<i64: 1>, scalar_prefetch = 0 : i64, scratch_operands = 0 : i64, tpu.core_type = #tpu.core_type<tc>, window_params = [{transform_indices = @transform_0, window_bounds = array<i64: 16, 32>}, {pipeline_mode = #tpu.pipeline_mode<synchronous>, transform_indices = @transform_1, window_bounds = array<i64: 32, 128>}, {pipeline_mode = #tpu.pipeline_mode<synchronous>, transform_indices = @transform_2, window_bounds = array<i64: 1, 128>}, {pipeline_mode = #tpu.pipeline_mode<synchronous>, transform_indices = @transform_3, window_bounds = array<i64: 128, 32>}, {pipeline_mode = #tpu.pipeline_mode<synchronous>, transform_indices = @transform_4, window_bounds = array<i64: 1, 32>}, {transform_indices = @transform_5, window_bounds = array<i64: 16, 32>}]} {
    %c0 = arith.constant 0 : index
    %c0_0 = arith.constant 0 : index
    %0 = vector.load %arg1[%c0, %c0_0] : memref<16x32xf32, #tpu.memory_space<vmem>>, vector<16x32xf32>
    %c0_1 = arith.constant 0 : index
    %c0_2 = arith.constant 0 : index
    %1 = vector.load %arg2[%c0_1, %c0_2] : memref<32x128xf32, #tpu.memory_space<vmem>>, vector<32x128xf32>
    %cst = arith.constant dense<0.000000e+00> : vector<16x128xf32>
    %2 = tpu.matmul %0, %1, %cst {dimension_numbers = #tpu.dot_dimension_numbers<[1], [0], [0], [1], [0, 0, 1, 1], [], []>} : vector<16x32xf32>, vector<32x128xf32>, vector<16x128xf32> -> vector<16x128xf32>
    %c0_3 = arith.constant 0 : index
    %c0_4 = arith.constant 0 : index
    %3 = vector.load %arg3[%c0_3, %c0_4] : memref<1x128xf32, #tpu.memory_space<vmem>>, vector<1x128xf32>
    %4 = vector.broadcast %3 : vector<1x128xf32> to vector<16x128xf32>
    %5 = arith.addf %2, %4 : vector<16x128xf32>
    %cst_5 = arith.constant 0.000000e+00 : f32
    %6 = vector.broadcast %cst_5 : f32 to vector<16x128xf32>
    %7 = arith.maximumf %5, %6 : vector<16x128xf32>
    %c0_6 = arith.constant 0 : index
    %c0_7 = arith.constant 0 : index
    %8 = vector.load %arg4[%c0_6, %c0_7] : memref<128x32xf32, #tpu.memory_space<vmem>>, vector<128x32xf32>
    %cst_8 = arith.constant dense<0.000000e+00> : vector<16x32xf32>
    %9 = tpu.matmul %7, %8, %cst_8 {dimension_numbers = #tpu.dot_dimension_numbers<[1], [0], [0], [1], [0, 0, 1, 1], [], []>} : vector<16x128xf32>, vector<128x32xf32>, vector<16x32xf32> -> vector<16x32xf32>
    %c0_9 = arith.constant 0 : index
    %c0_10 = arith.constant 0 : index
    %10 = vector.load %arg5[%c0_9, %c0_10] : memref<1x32xf32, #tpu.memory_space<vmem>>, vector<1x32xf32>
    %11 = vector.broadcast %10 : vector<1x32xf32> to vector<16x32xf32>
    %12 = arith.addf %9, %11 : vector<16x32xf32>
    %c0_11 = arith.constant 0 : index
    %c0_12 = arith.constant 0 : index
    %13 = vector.load %arg6[%c0_11, %c0_12] : memref<16x32xf32, #tpu.memory_space<vmem>>, vector<16x32xf32>
    tpu.vector_store %arg6[%c0_11, %c0_12], %12 {strides = array<i32>} : memref<16x32xf32, #tpu.memory_space<vmem>>, vector<16x32xf32>,
    return
  }
  func.func @transform_0(%arg0: i32) -> (i32, i32) {
    %c0_i32 = arith.constant 0 : i32
    %c0_i32_0 = arith.constant 0 : i32
    return %arg0, %c0_i32 : i32, i32
  }
  func.func @transform_1(%arg0: i32) -> (i32, i32) {
    %c0_i32 = arith.constant 0 : i32
    %c0_i32_0 = arith.constant 0 : i32
    %c0_i32_1 = arith.constant 0 : i32
    return %c0_i32, %c0_i32_0 : i32, i32
  }
  func.func @transform_2(%arg0: i32) -> (i32, i32) {
    %c0_i32 = arith.constant 0 : i32
    %c0_i32_0 = arith.constant 0 : i32
    %c0_i32_1 = arith.constant 0 : i32
    return %c0_i32, %c0_i32_0 : i32, i32
  }
  func.func @transform_3(%arg0: i32) -> (i32, i32) {
    %c0_i32 = arith.constant 0 : i32
    %c0_i32_0 = arith.constant 0 : i32
    %c0_i32_1 = arith.constant 0 : i32
    return %c0_i32, %c0_i32_0 : i32, i32
  }
  func.func @transform_4(%arg0: i32) -> (i32, i32) {
    %c0_i32 = arith.constant 0 : i32
    %c0_i32_0 = arith.constant 0 : i32
    %c0_i32_1 = arith.constant 0 : i32
    return %c0_i32, %c0_i32_0 : i32, i32
  }
  func.func @transform_5(%arg0: i32) -> (i32, i32) {
    %c0_i32 = arith.constant 0 : i32
    %c0_i32_0 = arith.constant 0 : i32
    return %arg0, %c0_i32 : i32, i32
  }
}

module attributes {stable_mosaic.version = 11 : i64} {
  func.func @_ffn_kernel(%arg0: i32, %arg1: memref<16x32xf32, #tpu.memory_space<vmem>>, %arg2: memref<32x128xf32, #tpu.memory_space<vmem>>, %arg3: memref<1x128xf32, #tpu.memory_space<vmem>>, %arg4: memref<128x32xf32, #tpu.memory_space<vmem>>, %arg5: memref<1x32xf32, #tpu.memory_space<vmem>>, %arg6: memref<16x32xf32, #tpu.memory_space<vmem>>) attributes {dimension_semantics = [#tpu.dimension_semantics<parallel>], iteration_bounds = array<i64: 1>, scalar_prefetch = 0 : i64, scratch_operands = 0 : i64, tpu.core_type = #tpu.core_type<tc>, window_params = [{transform_indices = @transform_0, window_bounds = array<i64: 16, 32>}, {pipeline_mode = #tpu.pipeline_mode<synchronous>, transform_indices = @transform_1, window_bounds = array<i64: 32, 128>}, {pipeline_mode = #tpu.pipeline_mode<synchronous>, transform_indices = @transform_2, window_bounds = array<i64: 1, 128>}, {pipeline_mode = #tpu.pipeline_mode<synchronous>, transform_indices = @transform_3, window_bounds = array<i64: 128, 32>}, {pipeline_mode = #tpu.pipeline_mode<synchronous>, transform_indices = @transform_4, window_bounds = array<i64: 1, 32>}, {transform_indices = @transform_5, window_bounds = array<i64: 16, 32>}]} {
    %c0 = arith.constant 0 : index
    %c0_0 = arith.constant 0 : index
    %0 = vector.load %arg1[%c0, %c0_0] : memref<16x32xf32, #tpu.memory_space<vmem>>, vector<16x32xf32>
    %c0_1 = arith.constant 0 : index
    %c0_2 = arith.constant 0 : index
    %1 = vector.load %arg2[%c0_1, %c0_2] : memref<32x128xf32, #tpu.memory_space<vmem>>, vector<32x128xf32>
    %cst = arith.constant dense<0.000000e+00> : vector<16x128xf32>
    %2 = tpu.matmul %0, %1, %cst {dimension_numbers = #tpu.dot_dimension_numbers<[1], [0], [0], [1], [0, 0, 1, 1], [], []>} : vector<16x32xf32>, vector<32x128xf32>, vector<16x128xf32> -> vector<16x128xf32>
    %c0_3 = arith.constant 0 : index
    %c0_4 = arith.constant 0 : index
    %3 = vector.load %arg3[%c0_3, %c0_4] : memref<1x128xf32, #tpu.memory_space<vmem>>, vector<1x128xf32>
    %4 = vector.broadcast %3 : vector<1x128xf32> to vector<16x128xf32>
    %5 = arith.addf %2, %4 : vector<16x128xf32>
    %cst_5 = arith.constant 0.000000e+00 : f32
    %6 = vector.broadcast %cst_5 : f32 to vector<16x128xf32>
    %7 = arith.maximumf %5, %6 : vector<16x128xf32>
    %c0_6 = arith.constant 0 : index
    %c0_7 = arith.constant 0 : index
    %8 = vector.load %arg4[%c0_6, %c0_7] : memref<128x32xf32, #tpu.memory_space<vmem>>, vector<128x32xf32>
    %cst_8 = arith.constant dense<0.000000e+00> : vector<16x32xf32>
    %9 = tpu.matmul %7, %8, %cst_8 {dimension_numbers = #tpu.dot_dimension_numbers<[1], [0], [0], [1], [0, 0, 1, 1], [], []>} : vector<16x128xf32>, vector<128x32xf32>, vector<16x32xf32> -> vector<16x32xf32>
    %c0_9 = arith.constant 0 : index
    %c0_10 = arith.constant 0 : index
    %10 = vector.load %arg5[%c0_9, %c0_10] : memref<1x32xf32, #tpu.memory_space<vmem>>, vector<1x32xf32>
    %11 = vector.broadcast %10 : vector<1x32xf32> to vector<16x32xf32>
    %12 = arith.addf %9, %11 : vector<16x32xf32>
    %c0_11 = arith.constant 0 : index
    %c0_12 = arith.constant 0 : index
    %13 = vector.load %arg6[%c0_11, %c0_12] : memref<16x32xf32, #tpu.memory_space<vmem>>, vector<16x32xf32>
    tpu.vector_store %arg6[%c0_11, %c0_12], %12 {strides = array<i32>} : memref<16x32xf32, #tpu.memory_space<vmem>>, vector<16x32xf32>,
    return
  }
  func.func @transform_0(%arg0: i32) -> (i32, i32) {
    %c0_i32 = arith.constant 0 : i32
    %c0_i32_0 = arith.constant 0 : i32
    return %arg0, %c0_i32 : i32, i32
  }
  func.func @transform_1(%arg0: i32) -> (i32, i32) {
    %c0_i32 = arith.constant 0 : i32
    %c0_i32_0 = arith.constant 0 : i32
    %c0_i32_1 = arith.constant 0 : i32
    return %c0_i32, %c0_i32_0 : i32, i32
  }
  func.func @transform_2(%arg0: i32) -> (i32, i32) {
    %c0_i32 = arith.constant 0 : i32
    %c0_i32_0 = arith.constant 0 : i32
    %c0_i32_1 = arith.constant 0 : i32
    return %c0_i32, %c0_i32_0 : i32, i32
  }
  func.func @transform_3(%arg0: i32) -> (i32, i32) {
    %c0_i32 = arith.constant 0 : i32
    %c0_i32_0 = arith.constant 0 : i32
    %c0_i32_1 = arith.constant 0 : i32
    return %c0_i32, %c0_i32_0 : i32, i32
  }
  func.func @transform_4(%arg0: i32) -> (i32, i32) {
    %c0_i32 = arith.constant 0 : i32
    %c0_i32_0 = arith.constant 0 : i32
    %c0_i32_1 = arith.constant 0 : i32
    return %c0_i32, %c0_i32_0 : i32, i32
  }
  func.func @transform_5(%arg0: i32) -> (i32, i32) {
    %c0_i32 = arith.constant 0 : i32
    %c0_i32_0 = arith.constant 0 : i32
    return %arg0, %c0_i32 : i32, i32
  }
}

</mosaic_0001>

<llo_original>
// kernel: tpu_custom_call.1
$region0: #{tpu_custom_call.1}
  #allocation0 [shape = 'u32[]', space=smem, size = 0x4, offset = 0x4, fixed_abs, tag = 'smem constant byte address 0x4 - core index']
  #allocation1 [shape = 'u32[144,128]{1,0:T(1,128)}', space=vmem, size = 0x12000, scoped, tag = 'internal scratch']
  %s0 = inlined_call_operand.vmem [shape: f32[16,32], index: 0, kind: input, shape index: {}]
  %s1 = inlined_call_operand.vmem [shape: f32[32,128], index: 1, kind: input, shape index: {}]
  %s2 = inlined_call_operand.vmem [shape: f32[1,128], index: 2, kind: input, shape index: {}]
  %s3 = inlined_call_operand.vmem [shape: f32[128,32], index: 3, kind: input, shape index: {}]
  %s4 = inlined_call_operand.vmem [shape: f32[1,32], index: 4, kind: input, shape index: {}]
  %s5 = inlined_call_operand.hbm [shape: f32[16,32], index: 5, kind: output, shape index: {}]
  %s6 = sld [smem:[#allocation0]]
  $region30: #{tpu_custom_call.1} parent=0
    _
  %s8 = ssub.s32 1, %s6
  %s9 = scalar_select 0, %s8, %s6
  $region1: #{tpu_custom_call.1} parent=0
    #allocation2 [shape = 'u8[8192]{0}', space=vmem, size = 0x2000, scoped, tag = 'output window, operand 0, single buffered']
    #allocation3 [shape = 's32[1]{0}', space=sflag, size = 0x4, scoped, tag = 'scoped memory for tpu_custom_call.1']
    %10 = vsyncpa [#allocation3], 0
    // Predicated region
    $region2: #{tpu_custom_call.1} parent=1 // pred_check
      _
    $region3: #{tpu_custom_call.1} parent=1 // pred_check_branch
      %12 = sbr.rel (0) target = $region5
    $region4: #{tpu_custom_call.1} parent=1 // pred_region
      _
    $region5: #{tpu_custom_call.1} parent=1 // pred_fallthru
      _
    // Predicated region
    $region6: #{tpu_custom_call.1} parent=1 // pred_check
      _
    $region7: #{tpu_custom_call.1} parent=1 // pred_check_branch
      %14 = sbr.rel (0) target = $region9
    $region8: #{tpu_custom_call.1} parent=1 // pred_region
      _
    $region9: #{tpu_custom_call.1} parent=1 // pred_fallthru
      _
    // Predicated region
    $region10: #{tpu_custom_call.1} parent=1 // pred_check
      _
    $region11: #{tpu_custom_call.1} parent=1 // pred_check_branch
      %16 = sbr.rel (0) target = $region13
    $region12: #{tpu_custom_call.1} parent=1 // pred_region
      _
    $region13: #{tpu_custom_call.1} parent=1 // pred_fallthru
      _
    // Predicated region
    $region14: #{tpu_custom_call.1} parent=1 // pred_check
      _
    $region15: #{tpu_custom_call.1} parent=1 // pred_check_branch
      %18 = sbr.rel (0) target = $region17
    $region16: #{tpu_custom_call.1} parent=1 // pred_region
      _
    $region17: #{tpu_custom_call.1} parent=1 // pred_fallthru
      _
    // Predicated region
    $region18: #{tpu_custom_call.1} parent=1 // pred_check
      _
    $region19: #{tpu_custom_call.1} parent=1 // pred_check_branch
      %20 = sbr.rel (0) target = $region21
    $region20: #{tpu_custom_call.1} parent=1 // pred_region
      _
    $region21: #{tpu_custom_call.1} parent=1 // pred_fallthru
      _
    %v21 = vld [vmem:[%s0] sm:$0xff]
    %v22 = vld [vmem:[%s0 + $0x8] sm:$0xff]
    %v23 = vld [vmem:[%s1] sm:$0xff]
    %v24 = vld [vmem:[%s1 + $0x8] sm:$0xff]
    %v25 = vld [vmem:[%s1 + $0x10] sm:$0xff]
    %v26 = vld [vmem:[%s1 + $0x18] sm:$0xff]
    %v27 = vld [vmem:[%s2] sm:$0x1]
    %v29 = vlaneseq
    %v30 = vshrl.u32 %v29, 7
    %v31 = vsub.s32 0, %v30
    %v32 = vrot.slane %v27, %v31
    %vm34 = vcmask 261120
    %v36 = vsel %vm34, %v21, 0
    %v39 = vsel %vm34, %v22, 0
    %41 = vmatprep.subr.mxu0 0.0
    %42 = vmatpush1.msra.mxu0 %v23
    %43 = vmatprep.subr.mxu0 0.0
    %44 = vmatpush1.msra.mxu0 %v24
    %45 = vmatprep.subr.mxu0 0.0
    %46 = vmatpush1.msra.mxu0 %v25
    %47 = vmatprep.subr.mxu0 0.0
    %48 = vmatpush1.msra.mxu0 %v26
    %49 = vmatprep.subr.mxu0 0.0
    %50 = vmatpush1.msra.mxu0 0.0
    %51 = vmatprep.subr.mxu0 0.0
    %52 = vmatpush1.msra.mxu0 0.0
    %53 = vmatprep.subr.mxu0 0.0
    %54 = vmatpush1.msra.mxu0 0.0
    %55 = vmatprep.subr.mxu0 0.0
    %56 = vmatpush1.msra.mxu0 0.0
    %57 = vmatprep.subr.mxu0 0.0
    %58 = vmatpush1.msra.mxu0 0.0
    %59 = vmatprep.subr.mxu0 0.0
    %60 = vmatpush1.msra.mxu0 0.0
    %61 = vmatprep.subr.mxu0 0.0
    %62 = vmatpush1.msra.mxu0 0.0
    %63 = vmatprep.subr.mxu0 0.0
    %64 = vmatpush1.msra.mxu0 0.0
    %65 = vmatprep.subr.mxu0 0.0
    %66 = vmatpush1.msra.mxu0 0.0
    %67 = vmatprep.subr.mxu0 0.0
    %68 = vmatpush1.msra.mxu0 0.0
    %69 = vmatprep.subr.mxu0 0.0
    %70 = vmatpush1.msra.mxu0 0.0
    %71 = vmatprep.subr.mxu0 0.0
    %72 = vmatpush1.msra.mxu0 0.0
    %73 = vmatprep.subr.mxu0 0.0
    %74 = vmatpush1.msra.mxu0 0.0
    %75 = vmatprep.subr.mxu0 0.0
    %76 = vmatpush1.msra.mxu0 0.0
    %77 = vmatprep.subr.mxu0 0.0
    %78 = vmatpush1.msra.mxu0 0.0
    %79 = vmatprep.subr.mxu0 0.0
    %80 = vmatpush1.msra.mxu0 0.0
    %81 = vmatprep.subr.mxu0 0.0
    %82 = vmatpush1.msra.mxu0 0.0
    %83 = vmatprep.subr.mxu0 0.0
    %84 = vmatpush1.msra.mxu0 0.0
    %85 = vmatprep.subr.mxu0 0.0
    %86 = vmatpush1.msra.mxu0 0.0
    %87 = vmatprep.subr.mxu0 0.0
    %88 = vmatpush1.msra.mxu0 0.0
    %89 = vmatprep.subr.mxu0 0.0
    %90 = vmatpush1.msra.mxu0 0.0
    %91 = vmatprep.subr.mxu0 0.0
    %92 = vmatpush1.msra.mxu0 0.0
    %93 = vmatprep.subr.mxu0 0.0
    %94 = vmatpush1.msra.mxu0 0.0
    %95 = vmatprep.subr.mxu0 0.0
    %96 = vmatpush1.msra.mxu0 0.0
    %97 = vmatprep.subr.mxu0 0.0
    %98 = vmatpush1.msra.mxu0 0.0
    %99 = vmatprep.subr.mxu0 0.0
    %100 = vmatpush1.msra.mxu0 0.0
    %101 = vmatprep.subr.mxu0 0.0
    %102 = vmatpush1.msra.mxu0 0.0
    %103 = vmatprep.subr.mxu0 0.0
    %104 = vmatpush1.msra.mxu0 0.0
    %105 = vmatprep.mubr.f32.mxu0 0.0
    %106 = vmatmul.mubr.f32.gmra.mrb[0].mxu0 %v36
    %v107 = vpop.f32.mrb[0].mxu0
    %v108 = vadd.f32 %v32, %v107
    %v109 = vpop.f32.mrb[0].mxu0
    %110 = vmatprep.mubr.f32.mxu0 0.0
    %111 = vmatmul.mubr.f32.gmra.mrb[0].mxu0 %v39
    %v112 = vpop.f32.mrb[0].mxu0
    %v113 = vadd.f32 %v32, %v112
    %v114 = vpop.f32.mrb[0].mxu0
    %115 = vdwg.mxu0
    %v116 = vmax.f32 %v108, 0.0
    %v117 = vmax.f32 %v113, 0.0
    %v118 = vld [vmem:[%s3] sm:$0xff]
    %v119 = vld [vmem:[%s3 + $0x8] sm:$0xff]
    %v120 = vld [vmem:[%s3 + $0x10] sm:$0xff]
    %v121 = vld [vmem:[%s3 + $0x18] sm:$0xff]
    %v122 = vld [vmem:[%s3 + $0x20] sm:$0xff]
    %v123 = vld [vmem:[%s3 + $0x28] sm:$0xff]
    %v124 = vld [vmem:[%s3 + $0x30] sm:$0xff]
    %v125 = vld [vmem:[%s3 + $0x38] sm:$0xff]
    %v126 = vld [vmem:[%s3 + $0x40] sm:$0xff]
    %v127 = vld [vmem:[%s3 + $0x48] sm:$0xff]
    %v128 = vld [vmem:[%s3 + $0x50] sm:$0xff]
    %v129 = vld [vmem:[%s3 + $0x58] sm:$0xff]
    %v130 = vld [vmem:[%s3 + $0x60] sm:$0xff]
    %v131 = vld [vmem:[%s3 + $0x68] sm:$0xff]
    %v132 = vld [vmem:[%s3 + $0x70] sm:$0xff]
    %v133 = vld [vmem:[%s3 + $0x78] sm:$0xff]
    %v134 = vld [vmem:[%s4] sm:$0x1]
    %v136 = vlaneseq
    %v137 = vshrl.u32 %v136, 7
    %v138 = vsub.s32 0, %v137
    %v139 = vrot.slane %v134, %v138
    %141 = vmatprep.subr.mxu0 0.0
    %142 = vmatpush1.msra.mxu0 %v118
    %143 = vmatprep.subr.mxu0 0.0
    %144 = vmatpush1.msra.mxu0 %v119
    %145 = vmatprep.subr.mxu0 0.0
    %146 = vmatpush1.msra.mxu0 %v120
    %147 = vmatprep.subr.mxu0 0.0
    %148 = vmatpush1.msra.mxu0 %v121
    %149 = vmatprep.subr.mxu0 0.0
    %150 = vmatpush1.msra.mxu0 %v122
    %151 = vmatprep.subr.mxu0 0.0
    %152 = vmatpush1.msra.mxu0 %v123
    %153 = vmatprep.subr.mxu0 0.0
    %154 = vmatpush1.msra.mxu0 %v124
    %155 = vmatprep.subr.mxu0 0.0
    %156 = vmatpush1.msra.mxu0 %v125
    %157 = vmatprep.subr.mxu0 0.0
    %158 = vmatpush1.msra.mxu0 %v126
    %159 = vmatprep.subr.mxu0 0.0
    %160 = vmatpush1.msra.mxu0 %v127
    %161 = vmatprep.subr.mxu0 0.0
    %162 = vmatpush1.msra.mxu0 %v128
    %163 = vmatprep.subr.mxu0 0.0
    %164 = vmatpush1.msra.mxu0 %v129
    %165 = vmatprep.subr.mxu0 0.0
    %166 = vmatpush1.msra.mxu0 %v130
    %167 = vmatprep.subr.mxu0 0.0
    %168 = vmatpush1.msra.mxu0 %v131
    %169 = vmatprep.subr.mxu0 0.0
    %170 = vmatpush1.msra.mxu0 %v132
    %171 = vmatprep.subr.mxu0 0.0
    %172 = vmatpush1.msra.mxu0 %v133
    %173 = vmatprep.subr.mxu0 0.0
    %174 = vmatpush1.msra.mxu0 0.0
    %175 = vmatprep.subr.mxu0 0.0
    %176 = vmatpush1.msra.mxu0 0.0
    %177 = vmatprep.subr.mxu0 0.0
    %178 = vmatpush1.msra.mxu0 0.0
    %179 = vmatprep.subr.mxu0 0.0
    %180 = vmatpush1.msra.mxu0 0.0
    %181 = vmatprep.subr.mxu0 0.0
    %182 = vmatpush1.msra.mxu0 0.0
    %183 = vmatprep.subr.mxu0 0.0
    %184 = vmatpush1.msra.mxu0 0.0
    %185 = vmatprep.subr.mxu0 0.0
    %186 = vmatpush1.msra.mxu0 0.0
    %187 = vmatprep.subr.mxu0 0.0
    %188 = vmatpush1.msra.mxu0 0.0
    %189 = vmatprep.subr.mxu0 0.0
    %190 = vmatpush1.msra.mxu0 0.0
    %191 = vmatprep.subr.mxu0 0.0
    %192 = vmatpush1.msra.mxu0 0.0
    %193 = vmatprep.subr.mxu0 0.0
    %194 = vmatpush1.msra.mxu0 0.0
    %195 = vmatprep.subr.mxu0 0.0
    %196 = vmatpush1.msra.mxu0 0.0
    %197 = vmatprep.subr.mxu0 0.0
    %198 = vmatpush1.msra.mxu0 0.0
    %199 = vmatprep.subr.mxu0 0.0
    %200 = vmatpush1.msra.mxu0 0.0
    %201 = vmatprep.subr.mxu0 0.0
    %202 = vmatpush1.msra.mxu0 0.0
    %203 = vmatprep.subr.mxu0 0.0
    %204 = vmatpush1.msra.mxu0 0.0
    %205 = vmatprep.mubr.f32.mxu0 0.0
    %206 = vmatmul.mubr.f32.gmra.mrb[0].mxu0 %v116
    %v207 = vpop.f32.mrb[0].mxu0
    %v208 = vadd.f32 %v139, %v207
    %v209 = vpop.f32.mrb[0].mxu0
    %210 = vmatprep.mubr.f32.mxu0 0.0
    %211 = vmatmul.mubr.f32.gmra.mrb[0].mxu0 %v117
    %v212 = vpop.f32.mrb[0].mxu0
    %v213 = vadd.f32 %v139, %v212
    %v214 = vpop.f32.mrb[0].mxu0
    %215 = vdwg.mxu0
    %216 = vst.msk [vmem:[#allocation2] sm:$0xff] %vm34, %v208
    %217 = vst.msk [vmem:[#allocation2 + $0x8] sm:$0xff] %vm34, %v213
    // Predicated region
    $region22: #{tpu_custom_call.1} parent=1 // pred_check
      _
    $region23: #{tpu_custom_call.1} parent=1 // pred_check_branch
      %219 = sbr.rel (0) target = $region25
    $region24: #{tpu_custom_call.1} parent=1 // pred_region
      %s221 = ssub.s32 256, 256
      %222 = vsyncadd [#allocation3], %s221
      %s223 = sshll.u32 [#allocation2], 4
      %s224 = int_to_ptr.vmem [resolvable:$true] %s223
      %229 = dma.vmem_to_hbm [thread:$0]  %s224, 256, %s5, [#allocation3], 128, 128, 8
    $region25: #{tpu_custom_call.1} parent=1 // pred_fallthru
      _
    // Predicated region
    $region26: #{tpu_custom_call.1} parent=1 // pred_check
      _
    $region27: #{tpu_custom_call.1} parent=1 // pred_check_branch
      %231 = sbr.rel (0) target = $region29
    $region28: #{tpu_custom_call.1} parent=1 // pred_region
      %232 = dma.done [#allocation3], 256
    $region29: #{tpu_custom_call.1} parent=1 // pred_fallthru
      _
    %233 = vsyncpa [#allocation3], 1

// kernel: tpu_custom_call.1
$region0: #{tpu_custom_call.1}
  #allocation0 [shape = 'u32[]', space=smem, size = 0x4, offset = 0x4, fixed_abs, tag = 'smem constant byte address 0x4 - core index']
  #allocation1 [shape = 'u32[144,128]{1,0:T(1,128)}', space=vmem, size = 0x12000, scoped, tag = 'internal scratch']
  %s0 = inlined_call_operand.vmem [shape: f32[16,32], index: 0, kind: input, shape index: {}]
  %s1 = inlined_call_operand.vmem [shape: f32[32,128], index: 1, kind: input, shape index: {}]
  %s2 = inlined_call_operand.vmem [shape: f32[1,128], index: 2, kind: input, shape index: {}]
  %s3 = inlined_call_operand.vmem [shape: f32[128,32], index: 3, kind: input, shape index: {}]
  %s4 = inlined_call_operand.vmem [shape: f32[1,32], index: 4, kind: input, shape index: {}]
  %s5 = inlined_call_operand.hbm [shape: f32[16,32], index: 5, kind: output, shape index: {}]
  %s6 = sld [smem:[#allocation0]]
  $region30: #{tpu_custom_call.1} parent=0
    _
  %s8 = ssub.s32 1, %s6
  %s9 = scalar_select 0, %s8, %s6
  $region1: #{tpu_custom_call.1} parent=0
    #allocation2 [shape = 'u8[8192]{0}', space=vmem, size = 0x2000, scoped, tag = 'output window, operand 0, single buffered']
    #allocation3 [shape = 's32[1]{0}', space=sflag, size = 0x4, scoped, tag = 'scoped memory for tpu_custom_call.1']
    %10 = vsyncpa [#allocation3], 0
    // Predicated region
    $region2: #{tpu_custom_call.1} parent=1 // pred_check
      _
    $region3: #{tpu_custom_call.1} parent=1 // pred_check_branch
      %12 = sbr.rel (0) target = $region5
    $region4: #{tpu_custom_call.1} parent=1 // pred_region
      _
    $region5: #{tpu_custom_call.1} parent=1 // pred_fallthru
      _
    // Predicated region
    $region6: #{tpu_custom_call.1} parent=1 // pred_check
      _
    $region7: #{tpu_custom_call.1} parent=1 // pred_check_branch
      %14 = sbr.rel (0) target = $region9
    $region8: #{tpu_custom_call.1} parent=1 // pred_region
      _
    $region9: #{tpu_custom_call.1} parent=1 // pred_fallthru
      _
    // Predicated region
    $region10: #{tpu_custom_call.1} parent=1 // pred_check
      _
    $region11: #{tpu_custom_call.1} parent=1 // pred_check_branch
      %16 = sbr.rel (0) target = $region13
    $region12: #{tpu_custom_call.1} parent=1 // pred_region
      _
    $region13: #{tpu_custom_call.1} parent=1 // pred_fallthru
      _
    // Predicated region
    $region14: #{tpu_custom_call.1} parent=1 // pred_check
      _
    $region15: #{tpu_custom_call.1} parent=1 // pred_check_branch
      %18 = sbr.rel (0) target = $region17
    $region16: #{tpu_custom_call.1} parent=1 // pred_region
      _
    $region17: #{tpu_custom_call.1} parent=1 // pred_fallthru
      _
    // Predicated region
    $region18: #{tpu_custom_call.1} parent=1 // pred_check
      _
    $region19: #{tpu_custom_call.1} parent=1 // pred_check_branch
      %20 = sbr.rel (0) target = $region21
    $region20: #{tpu_custom_call.1} parent=1 // pred_region
      _
    $region21: #{tpu_custom_call.1} parent=1 // pred_fallthru
      _
    %v21 = vld [vmem:[%s0] sm:$0xff]
    %v22 = vld [vmem:[%s0 + $0x8] sm:$0xff]
    %v23 = vld [vmem:[%s1] sm:$0xff]
    %v24 = vld [vmem:[%s1 + $0x8] sm:$0xff]
    %v25 = vld [vmem:[%s1 + $0x10] sm:$0xff]
    %v26 = vld [vmem:[%s1 + $0x18] sm:$0xff]
    %v27 = vld [vmem:[%s2] sm:$0x1]
    %v29 = vlaneseq
    %v30 = vshrl.u32 %v29, 7
    %v31 = vsub.s32 0, %v30
    %v32 = vrot.slane %v27, %v31
    %vm34 = vcmask 261120
    %v36 = vsel %vm34, %v21, 0
    %v39 = vsel %vm34, %v22, 0
    %41 = vmatprep.subr.mxu0 0.0
    %42 = vmatpush1.msra.mxu0 %v23
    %43 = vmatprep.subr.mxu0 0.0
    %44 = vmatpush1.msra.mxu0 %v24
    %45 = vmatprep.subr.mxu0 0.0
    %46 = vmatpush1.msra.mxu0 %v25
    %47 = vmatprep.subr.mxu0 0.0
    %48 = vmatpush1.msra.mxu0 %v26
    %49 = vmatprep.subr.mxu0 0.0
    %50 = vmatpush1.msra.mxu0 0.0
    %51 = vmatprep.subr.mxu0 0.0
    %52 = vmatpush1.msra.mxu0 0.0
    %53 = vmatprep.subr.mxu0 0.0
    %54 = vmatpush1.msra.mxu0 0.0
    %55 = vmatprep.subr.mxu0 0.0
    %56 = vmatpush1.msra.mxu0 0.0
    %57 = vmatprep.subr.mxu0 0.0
    %58 = vmatpush1.msra.mxu0 0.0
    %59 = vmatprep.subr.mxu0 0.0
    %60 = vmatpush1.msra.mxu0 0.0
    %61 = vmatprep.subr.mxu0 0.0
    %62 = vmatpush1.msra.mxu0 0.0
    %63 = vmatprep.subr.mxu0 0.0
    %64 = vmatpush1.msra.mxu0 0.0
    %65 = vmatprep.subr.mxu0 0.0
    %66 = vmatpush1.msra.mxu0 0.0
    %67 = vmatprep.subr.mxu0 0.0
    %68 = vmatpush1.msra.mxu0 0.0
    %69 = vmatprep.subr.mxu0 0.0
    %70 = vmatpush1.msra.mxu0 0.0
    %71 = vmatprep.subr.mxu0 0.0
    %72 = vmatpush1.msra.mxu0 0.0
    %73 = vmatprep.subr.mxu0 0.0
    %74 = vmatpush1.msra.mxu0 0.0
    %75 = vmatprep.subr.mxu0 0.0
    %76 = vmatpush1.msra.mxu0 0.0
    %77 = vmatprep.subr.mxu0 0.0
    %78 = vmatpush1.msra.mxu0 0.0
    %79 = vmatprep.subr.mxu0 0.0
    %80 = vmatpush1.msra.mxu0 0.0
    %81 = vmatprep.subr.mxu0 0.0
    %82 = vmatpush1.msra.mxu0 0.0
    %83 = vmatprep.subr.mxu0 0.0
    %84 = vmatpush1.msra.mxu0 0.0
    %85 = vmatprep.subr.mxu0 0.0
    %86 = vmatpush1.msra.mxu0 0.0
    %87 = vmatprep.subr.mxu0 0.0
    %88 = vmatpush1.msra.mxu0 0.0
    %89 = vmatprep.subr.mxu0 0.0
    %90 = vmatpush1.msra.mxu0 0.0
    %91 = vmatprep.subr.mxu0 0.0
    %92 = vmatpush1.msra.mxu0 0.0
    %93 = vmatprep.subr.mxu0 0.0
    %94 = vmatpush1.msra.mxu0 0.0
    %95 = vmatprep.subr.mxu0 0.0
    %96 = vmatpush1.msra.mxu0 0.0
    %97 = vmatprep.subr.mxu0 0.0
    %98 = vmatpush1.msra.mxu0 0.0
    %99 = vmatprep.subr.mxu0 0.0
    %100 = vmatpush1.msra.mxu0 0.0
    %101 = vmatprep.subr.mxu0 0.0
    %102 = vmatpush1.msra.mxu0 0.0
    %103 = vmatprep.subr.mxu0 0.0
    %104 = vmatpush1.msra.mxu0 0.0
    %105 = vmatprep.mubr.f32.mxu0 0.0
    %106 = vmatmul.mubr.f32.gmra.mrb[0].mxu0 %v36
    %v107 = vpop.f32.mrb[0].mxu0
    %v108 = vadd.f32 %v32, %v107
    %v109 = vpop.f32.mrb[0].mxu0
    %110 = vmatprep.mubr.f32.mxu0 0.0
    %111 = vmatmul.mubr.f32.gmra.mrb[0].mxu0 %v39
    %v112 = vpop.f32.mrb[0].mxu0
    %v113 = vadd.f32 %v32, %v112
    %v114 = vpop.f32.mrb[0].mxu0
    %115 = vdwg.mxu0
    %v116 = vmax.f32 %v108, 0.0
    %v117 = vmax.f32 %v113, 0.0
    %v118 = vld [vmem:[%s3] sm:$0xff]
    %v119 = vld [vmem:[%s3 + $0x8] sm:$0xff]
    %v120 = vld [vmem:[%s3 + $0x10] sm:$0xff]
    %v121 = vld [vmem:[%s3 + $0x18] sm:$0xff]
    %v122 = vld [vmem:[%s3 + $0x20] sm:$0xff]
    %v123 = vld [vmem:[%s3 + $0x28] sm:$0xff]
    %v124 = vld [vmem:[%s3 + $0x30] sm:$0xff]
    %v125 = vld [vmem:[%s3 + $0x38] sm:$0xff]
    %v126 = vld [vmem:[%s3 + $0x40] sm:$0xff]
    %v127 = vld [vmem:[%s3 + $0x48] sm:$0xff]
    %v128 = vld [vmem:[%s3 + $0x50] sm:$0xff]
    %v129 = vld [vmem:[%s3 + $0x58] sm:$0xff]
    %v130 = vld [vmem:[%s3 + $0x60] sm:$0xff]
    %v131 = vld [vmem:[%s3 + $0x68] sm:$0xff]
    %v132 = vld [vmem:[%s3 + $0x70] sm:$0xff]
    %v133 = vld [vmem:[%s3 + $0x78] sm:$0xff]
    %v134 = vld [vmem:[%s4] sm:$0x1]
    %v136 = vlaneseq
    %v137 = vshrl.u32 %v136, 7
    %v138 = vsub.s32 0, %v137
    %v139 = vrot.slane %v134, %v138
    %141 = vmatprep.subr.mxu0 0.0
    %142 = vmatpush1.msra.mxu0 %v118
    %143 = vmatprep.subr.mxu0 0.0
    %144 = vmatpush1.msra.mxu0 %v119
    %145 = vmatprep.subr.mxu0 0.0
    %146 = vmatpush1.msra.mxu0 %v120
    %147 = vmatprep.subr.mxu0 0.0
    %148 = vmatpush1.msra.mxu0 %v121
    %149 = vmatprep.subr.mxu0 0.0
    %150 = vmatpush1.msra.mxu0 %v122
    %151 = vmatprep.subr.mxu0 0.0
    %152 = vmatpush1.msra.mxu0 %v123
    %153 = vmatprep.subr.mxu0 0.0
    %154 = vmatpush1.msra.mxu0 %v124
    %155 = vmatprep.subr.mxu0 0.0
    %156 = vmatpush1.msra.mxu0 %v125
    %157 = vmatprep.subr.mxu0 0.0
    %158 = vmatpush1.msra.mxu0 %v126
    %159 = vmatprep.subr.mxu0 0.0
    %160 = vmatpush1.msra.mxu0 %v127
    %161 = vmatprep.subr.mxu0 0.0
    %162 = vmatpush1.msra.mxu0 %v128
    %163 = vmatprep.subr.mxu0 0.0
    %164 = vmatpush1.msra.mxu0 %v129
    %165 = vmatprep.subr.mxu0 0.0
    %166 = vmatpush1.msra.mxu0 %v130
    %167 = vmatprep.subr.mxu0 0.0
    %168 = vmatpush1.msra.mxu0 %v131
    %169 = vmatprep.subr.mxu0 0.0
    %170 = vmatpush1.msra.mxu0 %v132
    %171 = vmatprep.subr.mxu0 0.0
    %172 = vmatpush1.msra.mxu0 %v133
    %173 = vmatprep.subr.mxu0 0.0
    %174 = vmatpush1.msra.mxu0 0.0
    %175 = vmatprep.subr.mxu0 0.0
    %176 = vmatpush1.msra.mxu0 0.0
    %177 = vmatprep.subr.mxu0 0.0
    %178 = vmatpush1.msra.mxu0 0.0
    %179 = vmatprep.subr.mxu0 0.0
    %180 = vmatpush1.msra.mxu0 0.0
    %181 = vmatprep.subr.mxu0 0.0
    %182 = vmatpush1.msra.mxu0 0.0
    %183 = vmatprep.subr.mxu0 0.0
    %184 = vmatpush1.msra.mxu0 0.0
    %185 = vmatprep.subr.mxu0 0.0
    %186 = vmatpush1.msra.mxu0 0.0
    %187 = vmatprep.subr.mxu0 0.0
    %188 = vmatpush1.msra.mxu0 0.0
    %189 = vmatprep.subr.mxu0 0.0
    %190 = vmatpush1.msra.mxu0 0.0
    %191 = vmatprep.subr.mxu0 0.0
    %192 = vmatpush1.msra.mxu0 0.0
    %193 = vmatprep.subr.mxu0 0.0
    %194 = vmatpush1.msra.mxu0 0.0
    %195 = vmatprep.subr.mxu0 0.0
    %196 = vmatpush1.msra.mxu0 0.0
    %197 = vmatprep.subr.mxu0 0.0
    %198 = vmatpush1.msra.mxu0 0.0
    %199 = vmatprep.subr.mxu0 0.0
    %200 = vmatpush1.msra.mxu0 0.0
    %201 = vmatprep.subr.mxu0 0.0
    %202 = vmatpush1.msra.mxu0 0.0
    %203 = vmatprep.subr.mxu0 0.0
    %204 = vmatpush1.msra.mxu0 0.0
    %205 = vmatprep.mubr.f32.mxu0 0.0
    %206 = vmatmul.mubr.f32.gmra.mrb[0].mxu0 %v116
    %v207 = vpop.f32.mrb[0].mxu0
    %v208 = vadd.f32 %v139, %v207
    %v209 = vpop.f32.mrb[0].mxu0
    %210 = vmatprep.mubr.f32.mxu0 0.0
    %211 = vmatmul.mubr.f32.gmra.mrb[0].mxu0 %v117
    %v212 = vpop.f32.mrb[0].mxu0
    %v213 = vadd.f32 %v139, %v212
    %v214 = vpop.f32.mrb[0].mxu0
    %215 = vdwg.mxu0
    %216 = vst.msk [vmem:[#allocation2] sm:$0xff] %vm34, %v208
    %217 = vst.msk [vmem:[#allocation2 + $0x8] sm:$0xff] %vm34, %v213
    // Predicated region
    $region22: #{tpu_custom_call.1} parent=1 // pred_check
      _
    $region23: #{tpu_custom_call.1} parent=1 // pred_check_branch
      %219 = sbr.rel (0) target = $region25
    $region24: #{tpu_custom_call.1} parent=1 // pred_region
      %s221 = ssub.s32 256, 256
      %222 = vsyncadd [#allocation3], %s221
      %s223 = sshll.u32 [#allocation2], 4
      %s224 = int_to_ptr.vmem [resolvable:$true] %s223
      %229 = dma.vmem_to_hbm [thread:$0]  %s224, 256, %s5, [#allocation3], 128, 128, 8
    $region25: #{tpu_custom_call.1} parent=1 // pred_fallthru
      _
    // Predicated region
    $region26: #{tpu_custom_call.1} parent=1 // pred_check
      _
    $region27: #{tpu_custom_call.1} parent=1 // pred_check_branch
      %231 = sbr.rel (0) target = $region29
    $region28: #{tpu_custom_call.1} parent=1 // pred_region
      %232 = dma.done [#allocation3], 256
    $region29: #{tpu_custom_call.1} parent=1 // pred_fallthru
      _
    %233 = vsyncpa [#allocation3], 1

</llo_original>
